<compile_context>
chip_gen: v7x
topology: tpu7x:2x2x1
jax: 0.10.0
libtpu: 0.0.40
codegen_flags: <defaults>
</compile_context>

<pallas_src>
import jax
import jax.numpy as jnp
import numpy as np
from jax.experimental import pallas as pl
from jax.experimental.pallas import tpu as pltpu

LANE = 128


def _round_up(x, m):
    return (x + m - 1) // m * m


def norm_xw_kernel(a_ref, x_ref, w_ref, y_ref, d_ref, rowsum_acc):
    """Pass 1: degrees + scaled feature transform  y = D^-1/2 (X W)."""
    k = pl.program_id(1)
    nk = pl.num_programs(1)

    @pl.when(k == 0)
    def _():
        # self-loop contribution to the degree (tilde_A = A + I), no eye() needed
        rowsum_acc[...] = jnp.ones_like(rowsum_acc)

    rowsum_acc[...] += jnp.sum(a_ref[...].astype(jnp.float32), axis=-1, keepdims=True)

    @pl.when(k == nk - 1)
    def _():
        d = jax.lax.rsqrt(rowsum_acc[...])                       # (TM, 1) f32
        xw = jnp.dot(x_ref[...], w_ref[...],                     # bf16 MXU, f32 acc
                     preferred_element_type=jnp.float32)
        y_ref[...] = (d * xw).astype(y_ref.dtype)
        d_ref[...] = d


def aggregate_kernel(a_ref, yk_ref, yi_ref, di_ref, out_ref, acc_ref):
    """Pass 2: out = relu( D^-1/2 ( A @ y + y ) )."""
    k = pl.program_id(1)
    nk = pl.num_programs(1)

    @pl.when(k == 0)
    def _():
        # identity (self-loop) term of (A + I) @ y folded in as the initializer
        acc_ref[...] = yi_ref[...].astype(jnp.float32)

    acc_ref[...] += jnp.dot(a_ref[...], yk_ref[...],             # bf16 MXU, f32 acc
                            preferred_element_type=jnp.float32)

    @pl.when(k == nk - 1)
    def _():
        h = di_ref[...] * acc_ref[...]
        out_ref[...] = jnp.maximum(h, 0.0).astype(out_ref.dtype)


def specgcn_forward(x, adjs, W, *, tile=None):
    N, f_in = x.shape
    h_out = W.shape[1]

    # lane-dense padding of the matmul K / N dims and of the output stores
    f_pad = _round_up(f_in, LANE)
    h_pad = _round_up(h_out, LANE)
    if tile is None:
        # toy sizes -> single 128 tile; sweep 256-1024 for real graphs
        tile = min(512, _round_up(N, LANE))
    n_pad = _round_up(N, tile)

    # zero-pad + cast MXU operands to bf16 (0/1 adjacency is exact in bf16);
    # padded rows get degree 1 and zero features, so they contribute nothing.
    a_p = jnp.zeros((n_pad, n_pad), jnp.bfloat16).at[:N, :N].set(adjs.astype(jnp.bfloat16))
    x_p = jnp.zeros((n_pad, f_pad), jnp.bfloat16).at[:N, :f_in].set(x.astype(jnp.bfloat16))
    w_p = jnp.zeros((f_pad, h_pad), jnp.bfloat16).at[:f_in, :h_out].set(W.astype(jnp.bfloat16))

    nt = n_pad // tile
    grid = (nt, nt)                                  # (row tiles, reduction tiles)
    dim_sem = ("parallel", "arbitrary")
    vmem_limit = 32 * 1024 * 1024                    # explicit; headroom on v7x's 64 MiB

    # ---- pass 1: d = rsqrt(rowsum(A) + 1),  y = d * (x @ W) ----
    y, d = pl.pallas_call(
        norm_xw_kernel,
        out_shape=(jax.ShapeDtypeStruct((n_pad, h_pad), jnp.bfloat16),
                   jax.ShapeDtypeStruct((n_pad, 1), jnp.float32)),
        grid=grid,
        in_specs=[
            pl.BlockSpec((tile, tile), lambda i, k: (i, k)),      # A[i, k]
            pl.BlockSpec((tile, f_pad), lambda i, k: (i, 0)),     # x[i]
            pl.BlockSpec((f_pad, h_pad), lambda i, k: (0, 0)),    # W (resident)
        ],
        out_specs=(
            pl.BlockSpec((tile, h_pad), lambda i, k: (i, 0)),     # y[i]
            pl.BlockSpec((tile, 1), lambda i, k: (i, 0)),         # d[i]
        ),
        scratch_shapes=[pltpu.VMEM((tile, 1), jnp.float32)],
        compiler_params=pltpu.CompilerParams(
            dimension_semantics=dim_sem, vmem_limit_bytes=vmem_limit),
        cost_estimate=pl.CostEstimate(
            flops=int(n_pad * n_pad + 2 * n_pad * f_pad * h_pad),
            transcendentals=int(n_pad),
            bytes_accessed=int(2 * n_pad * n_pad + 2 * n_pad * f_pad
                               + 2 * f_pad * h_pad + 2 * n_pad * h_pad + 4 * n_pad)),
    )(a_p, x_p, w_p)

    # ---- pass 2: out = relu( d * (A @ y + y) ) ----
    out = pl.pallas_call(
        aggregate_kernel,
        out_shape=jax.ShapeDtypeStruct((n_pad, h_pad), jnp.float32),
        grid=grid,
        in_specs=[
            pl.BlockSpec((tile, tile), lambda i, k: (i, k)),      # A[i, k]
            pl.BlockSpec((tile, h_pad), lambda i, k: (k, 0)),     # y[k]  (matmul rhs)
            pl.BlockSpec((tile, h_pad), lambda i, k: (i, 0)),     # y[i]  (self-loop)
            pl.BlockSpec((tile, 1), lambda i, k: (i, 0)),         # d[i]
        ],
        out_specs=pl.BlockSpec((tile, h_pad), lambda i, k: (i, 0)),
        scratch_shapes=[pltpu.VMEM((tile, h_pad), jnp.float32)],
        compiler_params=pltpu.CompilerParams(
            dimension_semantics=dim_sem, vmem_limit_bytes=vmem_limit),
        cost_estimate=pl.CostEstimate(
            flops=int(2 * n_pad * n_pad * h_pad),
            transcendentals=0,
            bytes_accessed=int(2 * n_pad * n_pad + 2 * nt * n_pad * h_pad
                               + 2 * n_pad * h_pad + 4 * n_pad + 4 * n_pad * h_pad)),
    )(a_p, y, y, d)

    return out[:N, :h_out]


def specgcn_reference(x, adjs, W):
    N = adjs.shape[0]
    tilde_a = adjs.astype(jnp.float32) + jnp.eye(N, dtype=jnp.float32)
    deg = jnp.sum(tilde_a, axis=-1)
    d = jnp.power(deg, -0.5)
    dad = jnp.diag(d) @ tilde_a @ jnp.diag(d)
    h = dad @ (x.astype(jnp.float32) @ W.astype(jnp.float32))
    return jnp.maximum(h, 0.0)


def xavier_uniform(key, shape, gain):
    fan_in, fan_out = shape
    bound = gain * np.sqrt(6.0 / (fan_in + fan_out))
    return jax.random.uniform(key, shape, jnp.float32, minval=-bound, maxval=bound)


if __name__ == "__main__":
    key = jax.random.PRNGKey(0)
    k_x, k_a, k_w = jax.random.split(key, 3)

    N, input_dim, out_dim = 128, 32, 64

    # node features
    x = jax.random.normal(k_x, (N, input_dim), dtype=jnp.float32)

    # symmetric 0/1 adjacency (no self loops; they are folded in inside the kernels)
    a_rand = (jax.random.uniform(k_a, (N, N)) < 0.1).astype(jnp.float32)
    adjs = jnp.maximum(a_rand, a_rand.T) * (1.0 - jnp.eye(N, dtype=jnp.float32))

    # SpecGCNLayer weight: xavier_uniform_(gain=1.414)
    W = xavier_uniform(k_w, (input_dim, out_dim), gain=1.414)

    out = jax.block_until_ready(specgcn_forward(x, adjs, W))

    ref = specgcn_reference(x, adjs, W)
    # bf16 MXU operands with f32 accumulation -> bf16-level tolerance vs f32 reference
    np.testing.assert_allclose(np.asarray(out), np.asarray(ref), rtol=2e-2, atol=2e-2)

    print("KERNEL_OK")
</pallas_src>

<mosaic_0001>
module attributes {stable_mosaic.version = 11 : i64} {
  func.func @norm_xw_kernel(%arg0: i32, %arg1: i32, %arg2: memref<128x128xbf16, #tpu.memory_space<vmem>>, %arg3: memref<128x128xbf16, #tpu.memory_space<vmem>>, %arg4: memref<128x128xbf16, #tpu.memory_space<vmem>>, %arg5: memref<128x128xbf16, #tpu.memory_space<vmem>>, %arg6: memref<128x1xf32, #tpu.memory_space<vmem>>, %arg7: memref<128x1xf32, #tpu.memory_space<vmem>>) attributes {dimension_semantics = [#tpu.dimension_semantics<parallel>, #tpu.dimension_semantics<arbitrary>], iteration_bounds = array<i64: 1, 1>, scalar_prefetch = 0 : i64, scratch_operands = 1 : i64, tpu.core_type = #tpu.core_type<tc>, window_params = [{transform_indices = @transform_0, window_bounds = array<i64: 128, 128>}, {transform_indices = @transform_1, window_bounds = array<i64: 128, 128>}, {pipeline_mode = #tpu.pipeline_mode<synchronous>, transform_indices = @transform_2, window_bounds = array<i64: 128, 128>}, {transform_indices = @transform_3, window_bounds = array<i64: 128, 128>}, {transform_indices = @transform_4, window_bounds = array<i64: 128, 1>}]} {
    %c0_i32 = arith.constant 0 : i32
    %0 = arith.cmpi eq, %arg1, %c0_i32 : i32
    %1 = arith.extui %0 : i1 to i32
    %c0_i32_0 = arith.constant 0 : i32
    %2 = arith.cmpi ne, %1, %c0_i32_0 : i32
    scf.if %2 {
      %cst_8 = arith.constant 1.000000e+00 : f32
      %13 = vector.broadcast %cst_8 : f32 to vector<128x1xf32>
      %c0_9 = arith.constant 0 : index
      %c0_10 = arith.constant 0 : index
      %14 = vector.load %arg7[%c0_9, %c0_10] : memref<128x1xf32, #tpu.memory_space<vmem>>, vector<128x1xf32>
      tpu.vector_store %arg7[%c0_9, %c0_10], %13 {strides = array<i32>} : memref<128x1xf32, #tpu.memory_space<vmem>>, vector<128x1xf32>,
    } else {
    }
    %c0 = arith.constant 0 : index
    %c0_1 = arith.constant 0 : index
    %3 = vector.load %arg7[%c0, %c0_1] : memref<128x1xf32, #tpu.memory_space<vmem>>, vector<128x1xf32>
    %c0_2 = arith.constant 0 : index
    %c0_3 = arith.constant 0 : index
    %4 = vector.load %arg2[%c0_2, %c0_3] : memref<128x128xbf16, #tpu.memory_space<vmem>>, vector<128x128xbf16>
    %5 = arith.extf %4 : vector<128x128xbf16> to vector<128x128xf32>
    %cst = arith.constant dense<0.000000e+00> : vector<128xf32>
    %6 = vector.multi_reduction <add>, %5, %cst [1] : vector<128x128xf32> to vector<128xf32>
    %7 = vector.shape_cast %6 : vector<128xf32> to vector<128x1xf32>
    %8 = arith.addf %3, %7 : vector<128x1xf32>
    %c0_4 = arith.constant 0 : index
    %c0_5 = arith.constant 0 : index
    %9 = vector.load %arg7[%c0_4, %c0_5] : memref<128x1xf32, #tpu.memory_space<vmem>>, vector<128x1xf32>
    tpu.vector_store %arg7[%c0_4, %c0_5], %8 {strides = array<i32>} : memref<128x1xf32, #tpu.memory_space<vmem>>, vector<128x1xf32>,
    %c0_i32_6 = arith.constant 0 : i32
    %10 = arith.cmpi eq, %arg1, %c0_i32_6 : i32
    %11 = arith.extui %10 : i1 to i32
    %c0_i32_7 = arith.constant 0 : i32
    %12 = arith.cmpi ne, %11, %c0_i32_7 : i32
    scf.if %12 {
      %c0_8 = arith.constant 0 : index
      %c0_9 = arith.constant 0 : index
      %13 = vector.load %arg7[%c0_8, %c0_9] : memref<128x1xf32, #tpu.memory_space<vmem>>, vector<128x1xf32>
      %14 = math.rsqrt %13 : vector<128x1xf32>
      %c0_10 = arith.constant 0 : index
      %c0_11 = arith.constant 0 : index
      %15 = vector.load %arg3[%c0_10, %c0_11] : memref<128x128xbf16, #tpu.memory_space<vmem>>, vector<128x128xbf16>
      %c0_12 = arith.constant 0 : index
      %c0_13 = arith.constant 0 : index
      %16 = vector.load %arg4[%c0_12, %c0_13] : memref<128x128xbf16, #tpu.memory_space<vmem>>, vector<128x128xbf16>
      %cst_14 = arith.constant dense<0.000000e+00> : vector<128x128xf32>
      %17 = tpu.matmul %15, %16, %cst_14 {dimension_numbers = #tpu.dot_dimension_numbers<[1], [0], [0], [1], [0, 0, 1, 1], [], []>} : vector<128x128xbf16>, vector<128x128xbf16>, vector<128x128xf32> -> vector<128x128xf32>
      %18 = vector.broadcast %14 : vector<128x1xf32> to vector<128x128xf32>
      %19 = arith.mulf %18, %17 : vector<128x128xf32>
      %20 = arith.truncf %19 : vector<128x128xf32> to vector<128x128xbf16>
      %c0_15 = arith.constant 0 : index
      %c0_16 = arith.constant 0 : index
      %21 = vector.load %arg5[%c0_15, %c0_16] : memref<128x128xbf16, #tpu.memory_space<vmem>>, vector<128x128xbf16>
      tpu.vector_store %arg5[%c0_15, %c0_16], %20 {strides = array<i32>} : memref<128x128xbf16, #tpu.memory_space<vmem>>, vector<128x128xbf16>,
      %c0_17 = arith.constant 0 : index
      %c0_18 = arith.constant 0 : index
      %22 = vector.load %arg6[%c0_17, %c0_18] : memref<128x1xf32, #tpu.memory_space<vmem>>, vector<128x1xf32>
      tpu.vector_store %arg6[%c0_17, %c0_18], %14 {strides = array<i32>} : memref<128x1xf32, #tpu.memory_space<vmem>>, vector<128x1xf32>,
    } else {
    }
    return
  }
  func.func @transform_0(%arg0: i32, %arg1: i32) -> (i32, i32) {
    %c0_i32 = arith.constant 0 : i32
    return %arg0, %arg1 : i32, i32
  }
  func.func @transform_1(%arg0: i32, %arg1: i32) -> (i32, i32) {
    %c0_i32 = arith.constant 0 : i32
    %c0_i32_0 = arith.constant 0 : i32
    return %arg0, %c0_i32 : i32, i32
  }
  func.func @transform_2(%arg0: i32, %arg1: i32) -> (i32, i32) {
    %c0_i32 = arith.constant 0 : i32
    %c0_i32_0 = arith.constant 0 : i32
    %c0_i32_1 = arith.constant 0 : i32
    return %c0_i32, %c0_i32_0 : i32, i32
  }
  func.func @transform_3(%arg0: i32, %arg1: i32) -> (i32, i32) {
    %c0_i32 = arith.constant 0 : i32
    %c0_i32_0 = arith.constant 0 : i32
    return %arg0, %c0_i32 : i32, i32
  }
  func.func @transform_4(%arg0: i32, %arg1: i32) -> (i32, i32) {
    %c0_i32 = arith.constant 0 : i32
    %c0_i32_0 = arith.constant 0 : i32
    return %arg0, %c0_i32 : i32, i32
  }
}

</mosaic_0001>

<llo_original>
// kernel: tpu_custom_call.1
$region0: #{tpu_custom_call.1}
  #allocation0 [shape = 'u32[]', space=smem, size = 0x4, offset = 0x4, fixed_abs, tag = 'smem constant byte address 0x4 - core index']
  #allocation1 [shape = 'u32[144,128]{1,0:T(1,128)}', space=vmem, size = 0x12000, scoped, tag = 'internal scratch']
  #allocation2 [shape = 'f32[128,1]{1,0:T(8,128)}', space=vmem, size = 0x10000, scoped, tag = 'scratch operand']
  %s0 = inlined_call_operand.hbm [shape: bf16[128,128], index: 0, kind: input, shape index: {}]
  %s1 = inlined_call_operand.hbm [shape: bf16[128,128], index: 1, kind: input, shape index: {}]
  %s2 = inlined_call_operand.hbm [shape: bf16[128,128], index: 2, kind: input, shape index: {}]
  %s3 = inlined_call_operand.hbm [shape: bf16[128,128], index: 3, kind: output, shape index: {0}]
  %s4 = inlined_call_operand.vmem [shape: f32[128,1], index: 4, kind: output, shape index: {1}]
  %5 = xla_tuple %s3, %s4
  %s6 = sld [smem:[#allocation0]]
  $region50: #{tpu_custom_call.1} parent=0
    _
  %s8 = ssub.s32 1, %s6
  %s9 = scalar_select 0, %s8, %s6
  $region1: #{tpu_custom_call.1} parent=0
    #allocation3 [shape = 'u8[32768]{0}', space=vmem, size = 0x8000, scoped, tag = 'input window, operand 0, single buffered']
    #allocation4 [shape = 's32[1]{0}', space=sflag, size = 0x4, scoped, tag = 'scoped memory for tpu_custom_call.1']
    #allocation5 [shape = 's32[1]{0}', space=sflag, size = 0x4, scoped, tag = 'scoped memory for tpu_custom_call.1']
    #allocation6 [shape = 'u8[32768]{0}', space=vmem, size = 0x8000, scoped, tag = 'input window, operand 1, single buffered']
    #allocation7 [shape = 's32[1]{0}', space=sflag, size = 0x4, scoped, tag = 'scoped memory for tpu_custom_call.1']
    #allocation8 [shape = 'u8[32768]{0}', space=vmem, size = 0x8000, scoped, tag = 'input window, operand 2, single buffered']
    #allocation9 [shape = 'u8[32768]{0}', space=vmem, size = 0x8000, scoped, tag = 'output window, operand 0, single buffered']
    %10 = vsyncpa [#allocation4], 0
    %11 = vsyncpa [#allocation7], 0
    %12 = vsyncpa [#allocation5], 0
    // Predicated region
    $region2: #{tpu_custom_call.1} parent=1 // pred_check
      _
    $region3: #{tpu_custom_call.1} parent=1 // pred_check_branch
      %14 = sbr.rel (0) target = $region5
    $region4: #{tpu_custom_call.1} parent=1 // pred_region
      %s16 = ssub.s32 1024, 1024
      %17 = vsyncadd [#allocation4], %s16
      %s18 = sshll.u32 [#allocation3], 4
      %s19 = int_to_ptr.vmem [resolvable:$true] %s18
      %24 = dma.hbm_to_vmem [thread:$0]  %s0, 1024, %s19, [#allocation4], 64, 64, 4
    $region5: #{tpu_custom_call.1} parent=1 // pred_fallthru
      _
    // Predicated region
    $region6: #{tpu_custom_call.1} parent=1 // pred_check
      _
    $region7: #{tpu_custom_call.1} parent=1 // pred_check_branch
      %26 = sbr.rel (0) target = $region9
    $region8: #{tpu_custom_call.1} parent=1 // pred_region
      %s28 = ssub.s32 1024, 1024
      %29 = vsyncadd [#allocation7], %s28
      %s30 = sshll.u32 [#allocation6], 4
      %s31 = int_to_ptr.vmem [resolvable:$true] %s30
      %36 = dma.hbm_to_vmem [thread:$0]  %s1, 1024, %s31, [#allocation7], 64, 64, 4
    $region9: #{tpu_custom_call.1} parent=1 // pred_fallthru
      _
    // Predicated region
    $region10: #{tpu_custom_call.1} parent=1 // pred_check
      _
    $region11: #{tpu_custom_call.1} parent=1 // pred_check_branch
      %38 = sbr.rel (0) target = $region13
    $region12: #{tpu_custom_call.1} parent=1 // pred_region
      %s40 = ssub.s32 1024, 1024
      %41 = vsyncadd [#allocation7], %s40
      %s42 = sshll.u32 [#allocation8], 4
      %s43 = int_to_ptr.vmem [resolvable:$true] %s42
      %48 = dma.hbm_to_vmem [thread:$0]  %s2, 1024, %s43, [#allocation7], 64, 64, 4
    $region13: #{tpu_custom_call.1} parent=1 // pred_fallthru
      _
    // Predicated region
    $region14: #{tpu_custom_call.1} parent=1 // pred_check
      _
    $region15: #{tpu_custom_call.1} parent=1 // pred_check_branch
      %50 = sbr.rel (0) target = $region17
    $region16: #{tpu_custom_call.1} parent=1 // pred_region
      %51 = dma.done [#allocation4], 1024
    $region17: #{tpu_custom_call.1} parent=1 // pred_fallthru
      _
    // Predicated region
    $region18: #{tpu_custom_call.1} parent=1 // pred_check
      _
    $region19: #{tpu_custom_call.1} parent=1 // pred_check_branch
      %53 = sbr.rel (0) target = $region21
    $region20: #{tpu_custom_call.1} parent=1 // pred_region
      %54 = dma.done [#allocation7], 1024
    $region21: #{tpu_custom_call.1} parent=1 // pred_fallthru
      _
    // Predicated region
    $region22: #{tpu_custom_call.1} parent=1 // pred_check
      _
    $region23: #{tpu_custom_call.1} parent=1 // pred_check_branch
      %56 = sbr.rel (0) target = $region25
    $region24: #{tpu_custom_call.1} parent=1 // pred_region
      %57 = dma.done [#allocation7], 1024
    $region25: #{tpu_custom_call.1} parent=1 // pred_fallthru
      _
    %p59 = scmp.eq.s32.totalorder 0, 0
    // Predicated region
    $region26: #{tpu_custom_call.1} parent=1 // pred_check
      %p60 = pneg %p59
    $region27: #{tpu_custom_call.1} parent=1 // pred_check_branch
      %62 = sbr.rel (%p60) target = $region29
    $region28: #{tpu_custom_call.1} parent=1 // pred_region
      %vm63 = vcmask 7168
      %64 = vst.msk [vmem:[#allocation2] sm:$0xff] %vm63, 1.0
      %65 = vst.msk [vmem:[#allocation2 + $0x8] sm:$0xff] %vm63, 1.0
      %66 = vst.msk [vmem:[#allocation2 + $0x10] sm:$0xff] %vm63, 1.0
      %67 = vst.msk [vmem:[#allocation2 + $0x18] sm:$0xff] %vm63, 1.0
      %68 = vst.msk [vmem:[#allocation2 + $0x20] sm:$0xff] %vm63, 1.0
      %69 = vst.msk [vmem:[#allocation2 + $0x28] sm:$0xff] %vm63, 1.0
      %70 = vst.msk [vmem:[#allocation2 + $0x30] sm:$0xff] %vm63, 1.0
      %71 = vst.msk [vmem:[#allocation2 + $0x38] sm:$0xff] %vm63, 1.0
      %72 = vst.msk [vmem:[#allocation2 + $0x40] sm:$0xff] %vm63, 1.0
      %73 = vst.msk [vmem:[#allocation2 + $0x48] sm:$0xff] %vm63, 1.0
      %74 = vst.msk [vmem:[#allocation2 + $0x50] sm:$0xff] %vm63, 1.0
      %75 = vst.msk [vmem:[#allocation2 + $0x58] sm:$0xff] %vm63, 1.0
      %76 = vst.msk [vmem:[#allocation2 + $0x60] sm:$0xff] %vm63, 1.0
      %77 = vst.msk [vmem:[#allocation2 + $0x68] sm:$0xff] %vm63, 1.0
      %78 = vst.msk [vmem:[#allocation2 + $0x70] sm:$0xff] %vm63, 1.0
      %79 = vst.msk [vmem:[#allocation2 + $0x78] sm:$0xff] %vm63, 1.0
    $region29: #{tpu_custom_call.1} parent=1 // pred_fallthru
      _
    %v80 = vld [vmem:[#allocation2] sm:$0xff]
    %v81 = vld [vmem:[#allocation2 + $0x8] sm:$0xff]
    %v82 = vld [vmem:[#allocation2 + $0x10] sm:$0xff]
    %v83 = vld [vmem:[#allocation2 + $0x18] sm:$0xff]
    %v84 = vld [vmem:[#allocation2 + $0x20] sm:$0xff]
    %v85 = vld [vmem:[#allocation2 + $0x28] sm:$0xff]
    %v86 = vld [vmem:[#allocation2 + $0x30] sm:$0xff]
    %v87 = vld [vmem:[#allocation2 + $0x38] sm:$0xff]
    %v88 = vld [vmem:[#allocation2 + $0x40] sm:$0xff]
    %v89 = vld [vmem:[#allocation2 + $0x48] sm:$0xff]
    %v90 = vld [vmem:[#allocation2 + $0x50] sm:$0xff]
    %v91 = vld [vmem:[#allocation2 + $0x58] sm:$0xff]
    %v92 = vld [vmem:[#allocation2 + $0x60] sm:$0xff]
    %v93 = vld [vmem:[#allocation2 + $0x68] sm:$0xff]
    %v94 = vld [vmem:[#allocation2 + $0x70] sm:$0xff]
    %v95 = vld [vmem:[#allocation2 + $0x78] sm:$0xff]
    %v96 = vld [vmem:[#allocation3] sm:$0xf]
    %v97 = vld [vmem:[#allocation3 + $0x4] sm:$0xf]
    %v98 = vld [vmem:[#allocation3 + $0x8] sm:$0xf]
    %v99 = vld [vmem:[#allocation3 + $0xc] sm:$0xf]
    %v100 = vld [vmem:[#allocation3 + $0x10] sm:$0xf]
    %v101 = vld [vmem:[#allocation3 + $0x14] sm:$0xf]
    %v102 = vld [vmem:[#allocation3 + $0x18] sm:$0xf]
    %v103 = vld [vmem:[#allocation3 + $0x1c] sm:$0xf]
    %v104 = vld [vmem:[#allocation3 + $0x20] sm:$0xf]
    %v105 = vld [vmem:[#allocation3 + $0x24] sm:$0xf]
    %v106 = vld [vmem:[#allocation3 + $0x28] sm:$0xf]
    %v107 = vld [vmem:[#allocation3 + $0x2c] sm:$0xf]
    %v108 = vld [vmem:[#allocation3 + $0x30] sm:$0xf]
    %v109 = vld [vmem:[#allocation3 + $0x34] sm:$0xf]
    %v110 = vld [vmem:[#allocation3 + $0x38] sm:$0xf]
    %v111 = vld [vmem:[#allocation3 + $0x3c] sm:$0xf]
    %v112 = vunpack.c.l.bf16 %v96
    %v113 = vunpack.c.l.bf16 %v97
    %v114 = vunpack.c.l.bf16 %v98
    %v115 = vunpack.c.l.bf16 %v99
    %v116 = vunpack.c.l.bf16 %v100
    %v117 = vunpack.c.l.bf16 %v101
    %v118 = vunpack.c.l.bf16 %v102
    %v119 = vunpack.c.l.bf16 %v103
    %v120 = vunpack.c.l.bf16 %v104
    %v121 = vunpack.c.l.bf16 %v105
    %v122 = vunpack.c.l.bf16 %v106
    %v123 = vunpack.c.l.bf16 %v107
    %v124 = vunpack.c.l.bf16 %v108
    %v125 = vunpack.c.l.bf16 %v109
    %v126 = vunpack.c.l.bf16 %v110
    %v127 = vunpack.c.l.bf16 %v111
    %128 = vadd.xlane.f32.xlu0 %v112
    %v129 = vpop.xlane.xlu0 %128
    %130 = vadd.xlane.f32.xlu0 %v113
    %v131 = vpop.xlane.xlu0 %130
    %132 = vadd.xlane.f32.xlu0 %v114
    %v133 = vpop.xlane.xlu0 %132
    %134 = vadd.xlane.f32.xlu0 %v115
    %v135 = vpop.xlane.xlu0 %134
    %136 = vadd.xlane.f32.xlu0 %v116
    %v137 = vpop.xlane.xlu0 %136
    %138 = vadd.xlane.f32.xlu0 %v117
    %v139 = vpop.xlane.xlu0 %138
    %140 = vadd.xlane.f32.xlu0 %v118
    %v141 = vpop.xlane.xlu0 %140
    %142 = vadd.xlane.f32.xlu0 %v119
    %v143 = vpop.xlane.xlu0 %142
    %144 = vadd.xlane.f32.xlu0 %v120
    %v145 = vpop.xlane.xlu0 %144
    %146 = vadd.xlane.f32.xlu0 %v121
    %v147 = vpop.xlane.xlu0 %146
    %148 = vadd.xlane.f32.xlu0 %v122
    %v149 = vpop.xlane.xlu0 %148
    %150 = vadd.xlane.f32.xlu0 %v123
    %v151 = vpop.xlane.xlu0 %150
    %152 = vadd.xlane.f32.xlu0 %v124
    %v153 = vpop.xlane.xlu0 %152
    %154 = vadd.xlane.f32.xlu0 %v125
    %v155 = vpop.xlane.xlu0 %154
    %156 = vadd.xlane.f32.xlu0 %v126
    %v157 = vpop.xlane.xlu0 %156
    %158 = vadd.xlane.f32.xlu0 %v127
    %v159 = vpop.xlane.xlu0 %158
    %v160 = vadd.f32 %v80, %v129
    %v161 = vadd.f32 %v81, %v131
    %v162 = vadd.f32 %v82, %v133
    %v163 = vadd.f32 %v83, %v135
    %v164 = vadd.f32 %v84, %v137
    %v165 = vadd.f32 %v85, %v139
    %v166 = vadd.f32 %v86, %v141
    %v167 = vadd.f32 %v87, %v143
    %v168 = vadd.f32 %v88, %v145
    %v169 = vadd.f32 %v89, %v147
    %v170 = vadd.f32 %v90, %v149
    %v171 = vadd.f32 %v91, %v151
    %v172 = vadd.f32 %v92, %v153
    %v173 = vadd.f32 %v93, %v155
    %v174 = vadd.f32 %v94, %v157
    %v175 = vadd.f32 %v95, %v159
    %vm176 = vcmask 7168
    %177 = vst.msk [vmem:[#allocation2] sm:$0xff] %vm176, %v160
    %178 = vst.msk [vmem:[#allocation2 + $0x8] sm:$0xff] %vm176, %v161
    %179 = vst.msk [vmem:[#allocation2 + $0x10] sm:$0xff] %vm176, %v162
    %180 = vst.msk [vmem:[#allocation2 + $0x18] sm:$0xff] %vm176, %v163
    %181 = vst.msk [vmem:[#allocation2 + $0x20] sm:$0xff] %vm176, %v164
    %182 = vst.msk [vmem:[#allocation2 + $0x28] sm:$0xff] %vm176, %v165
    %183 = vst.msk [vmem:[#allocation2 + $0x30] sm:$0xff] %vm176, %v166
    %184 = vst.msk [vmem:[#allocation2 + $0x38] sm:$0xff] %vm176, %v167
    %185 = vst.msk [vmem:[#allocation2 + $0x40] sm:$0xff] %vm176, %v168
    %186 = vst.msk [vmem:[#allocation2 + $0x48] sm:$0xff] %vm176, %v169
    %187 = vst.msk [vmem:[#allocation2 + $0x50] sm:$0xff] %vm176, %v170
    %188 = vst.msk [vmem:[#allocation2 + $0x58] sm:$0xff] %vm176, %v171
    %189 = vst.msk [vmem:[#allocation2 + $0x60] sm:$0xff] %vm176, %v172
    %190 = vst.msk [vmem:[#allocation2 + $0x68] sm:$0xff] %vm176, %v173
    %191 = vst.msk [vmem:[#allocation2 + $0x70] sm:$0xff] %vm176, %v174
    %192 = vst.msk [vmem:[#allocation2 + $0x78] sm:$0xff] %vm176, %v175
    // Predicated region
    $region30: #{tpu_custom_call.1} parent=1 // pred_check
      %p193 = pneg %p59
    $region31: #{tpu_custom_call.1} parent=1 // pred_check_branch
      %195 = sbr.rel (%p193) target = $region33
    $region32: #{tpu_custom_call.1} parent=1 // pred_region
      %v196 = vld [vmem:[#allocation2] sm:$0xff]
      %v197 = vld [vmem:[#allocation2 + $0x8] sm:$0xff]
      %v198 = vld [vmem:[#allocation2 + $0x10] sm:$0xff]
      %v199 = vld [vmem:[#allocation2 + $0x18] sm:$0xff]
      %v200 = vld [vmem:[#allocation2 + $0x20] sm:$0xff]
      %v201 = vld [vmem:[#allocation2 + $0x28] sm:$0xff]
      %v202 = vld [vmem:[#allocation2 + $0x30] sm:$0xff]
      %v203 = vld [vmem:[#allocation2 + $0x38] sm:$0xff]
      %v204 = vld [vmem:[#allocation2 + $0x40] sm:$0xff]
      %v205 = vld [vmem:[#allocation2 + $0x48] sm:$0xff]
      %v206 = vld [vmem:[#allocation2 + $0x50] sm:$0xff]
      %v207 = vld [vmem:[#allocation2 + $0x58] sm:$0xff]
      %v208 = vld [vmem:[#allocation2 + $0x60] sm:$0xff]
      %v209 = vld [vmem:[#allocation2 + $0x68] sm:$0xff]
      %v210 = vld [vmem:[#allocation2 + $0x70] sm:$0xff]
      %v211 = vld [vmem:[#allocation2 + $0x78] sm:$0xff]
      %v212 = vrsqrt.pop %v196
      %v213 = vrsqrt.pop %v197
      %v214 = vrsqrt.pop %v198
      %v215 = vrsqrt.pop %v199
      %v216 = vrsqrt.pop %v200
      %v217 = vrsqrt.pop %v201
      %v218 = vrsqrt.pop %v202
      %v219 = vrsqrt.pop %v203
      %v220 = vrsqrt.pop %v204
      %v221 = vrsqrt.pop %v205
      %v222 = vrsqrt.pop %v206
      %v223 = vrsqrt.pop %v207
      %v224 = vrsqrt.pop %v208
      %v225 = vrsqrt.pop %v209
      %v226 = vrsqrt.pop %v210
      %v227 = vrsqrt.pop %v211
      %v228 = vld [vmem:[#allocation6] sm:$0xf]
      %v229 = vld [vmem:[#allocation6 + $0x4] sm:$0xf]
      %v230 = vld [vmem:[#allocation6 + $0x8] sm:$0xf]
      %v231 = vld [vmem:[#allocation6 + $0xc] sm:$0xf]
      %v232 = vld [vmem:[#allocation6 + $0x10] sm:$0xf]
      %v233 = vld [vmem:[#allocation6 + $0x14] sm:$0xf]
      %v234 = vld [vmem:[#allocation6 + $0x18] sm:$0xf]
      %v235 = vld [vmem:[#allocation6 + $0x1c] sm:$0xf]
      %v236 = vld [vmem:[#allocation6 + $0x20] sm:$0xf]
      %v237 = vld [vmem:[#allocation6 + $0x24] sm:$0xf]
      %v238 = vld [vmem:[#allocation6 + $0x28] sm:$0xf]
      %v239 = vld [vmem:[#allocation6 + $0x2c] sm:$0xf]
      %v240 = vld [vmem:[#allocation6 + $0x30] sm:$0xf]
      %v241 = vld [vmem:[#allocation6 + $0x34] sm:$0xf]
      %v242 = vld [vmem:[#allocation6 + $0x38] sm:$0xf]
      %v243 = vld [vmem:[#allocation6 + $0x3c] sm:$0xf]
      %v244 = vld [vmem:[#allocation8] sm:$0xf]
      %v245 = vld [vmem:[#allocation8 + $0x4] sm:$0xf]
      %v246 = vld [vmem:[#allocation8 + $0x8] sm:$0xf]
      %v247 = vld [vmem:[#allocation8 + $0xc] sm:$0xf]
      %v248 = vld [vmem:[#allocation8 + $0x10] sm:$0xf]
      %v249 = vld [vmem:[#allocation8 + $0x14] sm:$0xf]
      %v250 = vld [vmem:[#allocation8 + $0x18] sm:$0xf]
      %v251 = vld [vmem:[#allocation8 + $0x1c] sm:$0xf]
      %v252 = vld [vmem:[#allocation8 + $0x20] sm:$0xf]
      %v253 = vld [vmem:[#allocation8 + $0x24] sm:$0xf]
      %v254 = vld [vmem:[#allocation8 + $0x28] sm:$0xf]
      %v255 = vld [vmem:[#allocation8 + $0x2c] sm:$0xf]
      %v256 = vld [vmem:[#allocation8 + $0x30] sm:$0xf]
      %v257 = vld [vmem:[#allocation8 + $0x34] sm:$0xf]
      %v258 = vld [vmem:[#allocation8 + $0x38] sm:$0xf]
      %v259 = vld [vmem:[#allocation8 + $0x3c] sm:$0xf]
      %v276 = vunpack.c.l.b16 %v228
      %v277 = vunpack.c.l.b16 %v229
      %v278 = vunpack.c.l.b16 %v230
      %v279 = vunpack.c.l.b16 %v231
      %v280 = vunpack.c.l.b16 %v232
      %v281 = vunpack.c.l.b16 %v233
      %v282 = vunpack.c.l.b16 %v234
      %v283 = vunpack.c.l.b16 %v235
      %v284 = vunpack.c.l.b16 %v236
      %v285 = vunpack.c.l.b16 %v237
      %v286 = vunpack.c.l.b16 %v238
      %v287 = vunpack.c.l.b16 %v239
      %v288 = vunpack.c.l.b16 %v240
      %v289 = vunpack.c.l.b16 %v241
      %v290 = vunpack.c.l.b16 %v242
      %v291 = vunpack.c.l.b16 %v243
      %v292 = vpack.c.b16 %v277, %v276
      %v293 = vpack.c.b16 %v279, %v278
      %v294 = vpack.c.b16 %v281, %v280
      %v295 = vpack.c.b16 %v283, %v282
      %v296 = vpack.c.b16 %v285, %v284
      %v297 = vpack.c.b16 %v287, %v286
      %v298 = vpack.c.b16 %v289, %v288
      %v299 = vpack.c.b16 %v291, %v290
      %v324 = vunpack.c.l.b16 %v244
      %v325 = vunpack.c.l.b16 %v245
      %v326 = vunpack.c.l.b16 %v246
      %v327 = vunpack.c.l.b16 %v247
      %v328 = vunpack.c.l.b16 %v248
      %v329 = vunpack.c.l.b16 %v249
      %v330 = vunpack.c.l.b16 %v250
      %v331 = vunpack.c.l.b16 %v251
      %v332 = vunpack.c.l.b16 %v252
      %v333 = vunpack.c.l.b16 %v253
      %v334 = vunpack.c.l.b16 %v254
      %v335 = vunpack.c.l.b16 %v255
      %v336 = vunpack.c.l.b16 %v256
      %v337 = vunpack.c.l.b16 %v257
      %v338 = vunpack.c.l.b16 %v258
      %v339 = vunpack.c.l.b16 %v259
      %v340 = vpack.c.b16 %v325, %v324
      %v341 = vpack.c.b16 %v327, %v326
      %v342 = vpack.c.b16 %v329, %v328
      %v343 = vpack.c.b16 %v331, %v330
      %v344 = vpack.c.b16 %v333, %v332
      %v345 = vpack.c.b16 %v335, %v334
      %v346 = vpack.c.b16 %v337, %v336
      %v347 = vpack.c.b16 %v339, %v338
      %356 = vmatprep.subr.bf16.mxu0 0
      %357 = vmatpush1.bf16.msra.mxu0 %v340
      %358 = vmatprep.subr.bf16.mxu0 0
      %359 = vmatpush1.bf16.msra.mxu0 %v341
      %360 = vmatprep.subr.bf16.mxu0 0
      %361 = vmatpush1.bf16.msra.mxu0 %v342
      %362 = vmatprep.subr.bf16.mxu0 0
      %363 = vmatpush1.bf16.msra.mxu0 %v343
      %364 = vmatprep.subr.bf16.mxu0 0
      %365 = vmatpush1.bf16.msra.mxu0 %v344
      %366 = vmatprep.subr.bf16.mxu0 0
      %367 = vmatpush1.bf16.msra.mxu0 %v345
      %368 = vmatprep.subr.bf16.mxu0 0
      %369 = vmatpush1.bf16.msra.mxu0 %v346
      %370 = vmatprep.subr.bf16.mxu0 0
      %371 = vmatpush1.bf16.msra.mxu0 %v347
      %372 = vmatprep.subr.bf16.mxu0 0
      %373 = vmatpush1.bf16.msra.mxu0 0
      %374 = vmatprep.subr.bf16.mxu0 0
      %375 = vmatpush1.bf16.msra.mxu0 0
      %376 = vmatprep.subr.bf16.mxu0 0
      %377 = vmatpush1.bf16.msra.mxu0 0
      %378 = vmatprep.subr.bf16.mxu0 0
      %379 = vmatpush1.bf16.msra.mxu0 0
      %380 = vmatprep.subr.bf16.mxu0 0
      %381 = vmatpush1.bf16.msra.mxu0 0
      %382 = vmatprep.subr.bf16.mxu0 0
      %383 = vmatpush1.bf16.msra.mxu0 0
      %384 = vmatprep.subr.bf16.mxu0 0
      %385 = vmatpush1.bf16.msra.mxu0 0
      %386 = vmatprep.subr.bf16.mxu0 0
      %387 = vmatpush1.bf16.msra.mxu0 0
      %388 = vmatprep.mubr.bf16.mxu0 0
      %389 = vmatmul.mubr.bf16.gmra.mrb[0].mxu0 %v292
      %v390 = vpop.f32.mrb[0].mxu0
      %v391 = vadd.f32 0.0, %v390
      %v392 = vpop.f32.mrb[0].mxu0
      %v393 = vpop.f32.mrb[0].mxu0
      %v394 = vadd.f32 0.0, %v393
      %v395 = vpop.f32.mrb[0].mxu0
      %396 = vmatprep.mubr.bf16.mxu0 0
      %397 = vmatmul.mubr.bf16.gmra.mrb[0].mxu0 %v293
      %v398 = vpop.f32.mrb[0].mxu0
      %v399 = vadd.f32 0.0, %v398
      %v400 = vpop.f32.mrb[0].mxu0
      %v401 = vpop.f32.mrb[0].mxu0
      %v402 = vadd.f32 0.0, %v401
      %v403 = vpop.f32.mrb[0].mxu0
      %404 = vmatprep.mubr.bf16.mxu0 0
      %405 = vmatmul.mubr.bf16.gmra.mrb[0].mxu0 %v294
      %v406 = vpop.f32.mrb[0].mxu0
      %v407 = vadd.f32 0.0, %v406
      %v408 = vpop.f32.mrb[0].mxu0
      %v409 = vpop.f32.mrb[0].mxu0
      %v410 = vadd.f32 0.0, %v409
      %v411 = vpop.f32.mrb[0].mxu0
      %412 = vmatprep.mubr.bf16.mxu0 0
      %413 = vmatmul.mubr.bf16.gmra.mrb[0].mxu0 %v295
      %v414 = vpop.f32.mrb[0].mxu0
      %v415 = vadd.f32 0.0, %v414
      %v416 = vpop.f32.mrb[0].mxu0
      %v417 = vpop.f32.mrb[0].mxu0
      %v418 = vadd.f32 0.0, %v417
      %v419 = vpop.f32.mrb[0].mxu0
      %420 = vmatprep.mubr.bf16.mxu0 0
      %421 = vmatmul.mubr.bf16.gmra.mrb[0].mxu0 %v296
      %v422 = vpop.f32.mrb[0].mxu0
      %v423 = vadd.f32 0.0, %v422
      %v424 = vpop.f32.mrb[0].mxu0
      %v425 = vpop.f32.mrb[0].mxu0
      %v426 = vadd.f32 0.0, %v425
      %v427 = vpop.f32.mrb[0].mxu0
      %428 = vmatprep.mubr.bf16.mxu0 0
      %429 = vmatmul.mubr.bf16.gmra.mrb[0].mxu0 %v297
      %v430 = vpop.f32.mrb[0].mxu0
      %v431 = vadd.f32 0.0, %v430
      %v432 = vpop.f32.mrb[0].mxu0
      %v433 = vpop.f32.mrb[0].mxu0
      %v434 = vadd.f32 0.0, %v433
      %v435 = vpop.f32.mrb[0].mxu0
      %436 = vmatprep.mubr.bf16.mxu0 0
      %437 = vmatmul.mubr.bf16.gmra.mrb[0].mxu0 %v298
      %v438 = vpop.f32.mrb[0].mxu0
      %v439 = vadd.f32 0.0, %v438
      %v440 = vpop.f32.mrb[0].mxu0
      %v441 = vpop.f32.mrb[0].mxu0
      %v442 = vadd.f32 0.0, %v441
      %v443 = vpop.f32.mrb[0].mxu0
      %444 = vmatprep.mubr.bf16.mxu0 0
      %445 = vmatmul.mubr.bf16.gmra.mrb[0].mxu0 %v299
      %v446 = vpop.f32.mrb[0].mxu0
      %v447 = vadd.f32 0.0, %v446
      %v448 = vpop.f32.mrb[0].mxu0
      %v449 = vpop.f32.mrb[0].mxu0
      %v450 = vadd.f32 0.0, %v449
      %v451 = vpop.f32.mrb[0].mxu0
      %452 = vdwg.mxu0
      %454 = vset.pattern.permute.xlu0 0
      %455 = vperm.xlu0 %454, %v212
      %v456 = vpop.permute.xlu0 %455
      %459 = vset.pattern.permute.xlu0 0
      %460 = vperm.xlu0 %459, %v213
      %v461 = vpop.permute.xlu0 %460
      %464 = vset.pattern.permute.xlu0 0
      %465 = vperm.xlu0 %464, %v214
      %v466 = vpop.permute.xlu0 %465
      %469 = vset.pattern.permute.xlu0 0
      %470 = vperm.xlu0 %469, %v215
      %v471 = vpop.permute.xlu0 %470
      %474 = vset.pattern.permute.xlu0 0
      %475 = vperm.xlu0 %474, %v216
      %v476 = vpop.permute.xlu0 %475
      %479 = vset.pattern.permute.xlu0 0
      %480 = vperm.xlu0 %479, %v217
      %v481 = vpop.permute.xlu0 %480
      %484 = vset.pattern.permute.xlu0 0
      %485 = vperm.xlu0 %484, %v218
      %v486 = vpop.permute.xlu0 %485
      %489 = vset.pattern.permute.xlu0 0
      %490 = vperm.xlu0 %489, %v219
      %v491 = vpop.permute.xlu0 %490
      %494 = vset.pattern.permute.xlu0 0
      %495 = vperm.xlu0 %494, %v220
      %v496 = vpop.permute.xlu0 %495
      %499 = vset.pattern.permute.xlu0 0
      %500 = vperm.xlu0 %499, %v221
      %v501 = vpop.permute.xlu0 %500
      %504 = vset.pattern.permute.xlu0 0
      %505 = vperm.xlu0 %504, %v222
      %v506 = vpop.permute.xlu0 %505
      %509 = vset.pattern.permute.xlu0 0
      %510 = vperm.xlu0 %509, %v223
      %v511 = vpop.permute.xlu0 %510
      %514 = vset.pattern.permute.xlu0 0
      %515 = vperm.xlu0 %514, %v224
      %v516 = vpop.permute.xlu0 %515
      %519 = vset.pattern.permute.xlu0 0
      %520 = vperm.xlu0 %519, %v225
      %v521 = vpop.permute.xlu0 %520
      %524 = vset.pattern.permute.xlu0 0
      %525 = vperm.xlu0 %524, %v226
      %v526 = vpop.permute.xlu0 %525
      %529 = vset.pattern.permute.xlu0 0
      %530 = vperm.xlu0 %529, %v227
      %v531 = vpop.permute.xlu0 %530
      %v533 = vmul.f32 %v456, %v391
      %v534 = vmul.f32 %v461, %v394
      %v535 = vmul.f32 %v466, %v399
      %v536 = vmul.f32 %v471, %v402
      %v537 = vmul.f32 %v476, %v407
      %v538 = vmul.f32 %v481, %v410
      %v539 = vmul.f32 %v486, %v415
      %v540 = vmul.f32 %v491, %v418
      %v541 = vmul.f32 %v496, %v423
      %v542 = vmul.f32 %v501, %v426
      %v543 = vmul.f32 %v506, %v431
      %v544 = vmul.f32 %v511, %v434
      %v545 = vmul.f32 %v516, %v439
      %v546 = vmul.f32 %v521, %v442
      %v547 = vmul.f32 %v526, %v447
      %v548 = vmul.f32 %v531, %v450
      %v549 = vpack.c.bf16 %v534, %v533
      %v550 = vpack.c.bf16 %v536, %v535
      %v551 = vpack.c.bf16 %v538, %v537
      %v552 = vpack.c.bf16 %v540, %v539
      %v553 = vpack.c.bf16 %v542, %v541
      %v554 = vpack.c.bf16 %v544, %v543
      %v555 = vpack.c.bf16 %v546, %v545
      %v556 = vpack.c.bf16 %v548, %v547
      %v565 = vunpack.c.l.b16 %v549
      %v566 = vunpack.c.h.b16 %v549
      %v567 = vunpack.c.l.b16 %v550
      %v568 = vunpack.c.h.b16 %v550
      %v569 = vunpack.c.l.b16 %v551
      %v570 = vunpack.c.h.b16 %v551
      %v571 = vunpack.c.l.b16 %v552
      %v572 = vunpack.c.h.b16 %v552
      %v573 = vunpack.c.l.b16 %v553
      %v574 = vunpack.c.h.b16 %v553
      %v575 = vunpack.c.l.b16 %v554
      %v576 = vunpack.c.h.b16 %v554
      %v577 = vunpack.c.l.b16 %v555
      %v578 = vunpack.c.h.b16 %v555
      %v579 = vunpack.c.l.b16 %v556
      %v580 = vunpack.c.h.b16 %v556
      %v581 = vpack.c.b16 %v565, %v565
      %v582 = vpack.c.b16 %v566, %v566
      %v583 = vpack.c.b16 %v567, %v567
      %v584 = vpack.c.b16 %v568, %v568
      %v585 = vpack.c.b16 %v569, %v569
      %v586 = vpack.c.b16 %v570, %v570
      %v587 = vpack.c.b16 %v571, %v571
      %v588 = vpack.c.b16 %v572, %v572
      %v589 = vpack.c.b16 %v573, %v573
      %v590 = vpack.c.b16 %v574, %v574
      %v591 = vpack.c.b16 %v575, %v575
      %v592 = vpack.c.b16 %v576, %v576
      %v593 = vpack.c.b16 %v577, %v577
      %v594 = vpack.c.b16 %v578, %v578
      %v595 = vpack.c.b16 %v579, %v579
      %v596 = vpack.c.b16 %v580, %v580
      %613 = vst [vmem:[#allocation9] sm:$0xf] %v581
      %614 = vst [vmem:[#allocation9 + $0x4] sm:$0xf] %v582
      %615 = vst [vmem:[#allocation9 + $0x8] sm:$0xf] %v583
      %616 = vst [vmem:[#allocation9 + $0xc] sm:$0xf] %v584
      %617 = vst [vmem:[#allocation9 + $0x10] sm:$0xf] %v585
      %618 = vst [vmem:[#allocation9 + $0x14] sm:$0xf] %v586
      %619 = vst [vmem:[#allocation9 + $0x18] sm:$0xf] %v587
      %620 = vst [vmem:[#allocation9 + $0x1c] sm:$0xf] %v588
      %621 = vst [vmem:[#allocation9 + $0x20] sm:$0xf] %v589
      %622 = vst [vmem:[#allocation9 + $0x24] sm:$0xf] %v590
      %623 = vst [vmem:[#allocation9 + $0x28] sm:$0xf] %v591
      %624 = vst [vmem:[#allocation9 + $0x2c] sm:$0xf] %v592
      %625 = vst [vmem:[#allocation9 + $0x30] sm:$0xf] %v593
      %626 = vst [vmem:[#allocation9 + $0x34] sm:$0xf] %v594
      %627 = vst [vmem:[#allocation9 + $0x38] sm:$0xf] %v595
      %628 = vst [vmem:[#allocation9 + $0x3c] sm:$0xf] %v596
      %629 = vst.msk [vmem:[%s4] sm:$0xff] %vm176, %v212
      %630 = vst.msk [vmem:[%s4 + $0x8] sm:$0xff] %vm176, %v213
      %631 = vst.msk [vmem:[%s4 + $0x10] sm:$0xff] %vm176, %v214
      %632 = vst.msk [vmem:[%s4 + $0x18] sm:$0xff] %vm176, %v215
      %633 = vst.msk [vmem:[%s4 + $0x20] sm:$0xff] %vm176, %v216
      %634 = vst.msk [vmem:[%s4 + $0x28] sm:$0xff] %vm176, %v217
      %635 = vst.msk [vmem:[%s4 + $0x30] sm:$0xff] %vm176, %v218
      %636 = vst.msk [vmem:[%s4 + $0x38] sm:$0xff] %vm176, %v219
      %637 = vst.msk [vmem:[%s4 + $0x40] sm:$0xff] %vm176, %v220
      %638 = vst.msk [vmem:[%s4 + $0x48] sm:$0xff] %vm176, %v221
      %639 = vst.msk [vmem:[%s4 + $0x50] sm:$0xff] %vm176, %v222
      %640 = vst.msk [vmem:[%s4 + $0x58] sm:$0xff] %vm176, %v223
      %641 = vst.msk [vmem:[%s4 + $0x60] sm:$0xff] %vm176, %v224
      %642 = vst.msk [vmem:[%s4 + $0x68] sm:$0xff] %vm176, %v225
      %643 = vst.msk [vmem:[%s4 + $0x70] sm:$0xff] %vm176, %v226
      %644 = vst.msk [vmem:[%s4 + $0x78] sm:$0xff] %vm176, %v227
    $region33: #{tpu_custom_call.1} parent=1 // pred_fallthru
      _
    // Predicated region
    $region34: #{tpu_custom_call.1} parent=1 // pred_check
      _
    $region35: #{tpu_custom_call.1} parent=1 // pred_check_branch
      %646 = sbr.rel (0) target = $region37
    $region36: #{tpu_custom_call.1} parent=1 // pred_region
      %s648 = ssub.s32 1024, 1024
      %649 = vsyncadd [#allocation5], %s648
      %s650 = sshll.u32 [#allocation9], 4
      %s651 = int_to_ptr.vmem [resolvable:$true] %s650
      %656 = dma.vmem_to_hbm [thread:$0]  %s651, 1024, %s3, [#allocation5], 64, 64, 4
    $region37: #{tpu_custom_call.1} parent=1 // pred_fallthru
      _
    // Predicated region
    $region38: #{tpu_custom_call.1} parent=1 // pred_check
      _
    $region39: #{tpu_custom_call.1} parent=1 // pred_check_branch
      %658 = sbr.rel (0) target = $region41
    $region40: #{tpu_custom_call.1} parent=1 // pred_region
      _
    $region41: #{tpu_custom_call.1} parent=1 // pred_fallthru
      _
    // Predicated region
    $region42: #{tpu_custom_call.1} parent=1 // pred_check
      _
    $region43: #{tpu_custom_call.1} parent=1 // pred_check_branch
      %660 = sbr.rel (0) target = $region45
    $region44: #{tpu_custom_call.1} parent=1 // pred_region
      %661 = dma.done [#allocation5], 1024
    $region45: #{tpu_custom_call.1} parent=1 // pred_fallthru
      _
    // Predicated region
    $region46: #{tpu_custom_call.1} parent=1 // pred_check
      _
    $region47: #{tpu_custom_call.1} parent=1 // pred_check_branch
      %663 = sbr.rel (0) target = $region49
    $region48: #{tpu_custom_call.1} parent=1 // pred_region
      _
    $region49: #{tpu_custom_call.1} parent=1 // pred_fallthru
      _
    %664 = vsyncpa [#allocation4], 1
    %665 = vsyncpa [#allocation7], 1
    %666 = vsyncpa [#allocation5], 1

</llo_original>
